<compile_context>
chip_gen: v7x
topology: tpu7x:2x2x1
jax: 0.10.0
libtpu: 0.0.40
codegen_flags: <defaults>
</compile_context>

<pallas_src>
import functools

import jax
import jax.numpy as jnp
from jax.experimental import pallas as pl
from jax.experimental.pallas import tpu as pltpu

EPS = 1e-5  # InstanceNorm2d default eps


def conv_block_kernel(x_ref, w_ref, b_ref, o_ref, xp_ref, slab_ref,
                      *, H, W, Cin, Cout):
    # x_ref   : (1, Cin, H*W)     one sample, NCHW flattened (lane-dense)
    # w_ref   : (Cout, 9*Cin)     im2col weights, column index = tap*Cin + cin
    # b_ref   : (Cout, 1)         conv bias
    # o_ref   : (1, Cout, H*W)    output, NCHW flattened (lane-dense)
    # xp_ref  : (Cin, (H+4)*W)    VMEM scratch: sample with 2 zero rows top & bottom
    # slab_ref: (9*Cin, H*W)      VMEM scratch: im2col slab
    HW = H * W

    # --- Build the vertically zero-padded sample in VMEM scratch ---------------
    # Rows 0,1 and H+2,H+3 are zero; data occupies rows 2 .. H+1.
    zeros_border = jnp.zeros((Cin, 2 * W), dtype=xp_ref.dtype)
    xp_ref[:, pl.ds(0, 2 * W)] = zeros_border
    xp_ref[:, pl.ds((H + 2) * W, 2 * W)] = zeros_border
    xp_ref[:, pl.ds(2 * W, HW)] = x_ref[0]

    # Horizontal-border masks (the vertical border is handled by the zero rows).
    col = jax.lax.broadcasted_iota(jnp.int32, (1, HW), 1) % W
    left_ok = col >= 1        # tap reads column w-1 -> invalid at w == 0
    right_ok = col <= W - 2   # tap reads column w+1 -> invalid at w == W-1

    # --- im2col: 9 shifted/masked lane-dense taps stacked along sublanes -------
    # out[p] for tap (kh,kw) uses xp[p + (kh+1)*W + (kw-1)]   (p = h*W + w)
    for kh in range(3):
        for kw in range(3):
            t = kh * 3 + kw
            start = (kh + 1) * W + (kw - 1)
            tap = xp_ref[:, pl.ds(start, HW)]            # (Cin, H*W), static slice
            if kw == 0:
                tap = jnp.where(left_ok, tap, 0.0)
            elif kw == 2:
                tap = jnp.where(right_ok, tap, 0.0)
            slab_ref[pl.ds(t * Cin, Cin), :] = tap

    # --- Whole 3x3 conv as a single MXU matmul ----------------------------------
    acc = jnp.dot(w_ref[...], slab_ref[...],
                  preferred_element_type=jnp.float32)    # (Cout, H*W) f32
    acc = acc + b_ref[...]                               # (Cout, 1) broadcast

    # --- InstanceNorm2d (affine=False, biased variance, eps=1e-5) --------------
    mean = jnp.mean(acc, axis=1, keepdims=True)
    var = jnp.mean((acc - mean) ** 2, axis=1, keepdims=True)
    y = (acc - mean) * jax.lax.rsqrt(var + EPS)

    # --- ReLU -------------------------------------------------------------------
    y = jnp.maximum(y, 0.0)

    # --- Dropout2d ---------------------------------------------------------------
    # Identity in eval mode (PyTorch inference semantics).
    # TODO(synk): training-mode Dropout2d (per-channel Bernoulli mask, 1/(1-p)
    # scale) not reproduced; torch RNG stream cannot be matched anyway.

    o_ref[0] = y.astype(o_ref.dtype)


def conv_block_forward(x_nchw, weight, bias):
    """x_nchw: (N, Cin, H, W); weight: (Cout, Cin, 3, 3); bias: (Cout,)."""
    N, Cin, H, W = x_nchw.shape
    Cout = weight.shape[0]
    HW = H * W

    x = x_nchw.reshape(N, Cin, HW)                       # free reshape, stays NCHW
    # im2col weight layout: column index = (kh*3 + kw)*Cin + cin  (tiny prep)
    w = jnp.transpose(weight, (0, 2, 3, 1)).reshape(Cout, 9 * Cin)
    b = bias.reshape(Cout, 1)

    kernel = functools.partial(conv_block_kernel, H=H, W=W, Cin=Cin, Cout=Cout)
    out = pl.pallas_call(
        kernel,
        out_shape=jax.ShapeDtypeStruct((N, Cout, HW), x_nchw.dtype),
        grid_spec=pltpu.PrefetchScalarGridSpec(
            num_scalar_prefetch=0,
            grid=(N,),  # one program per sample (InstanceNorm is per-sample)
            in_specs=[
                pl.BlockSpec((1, Cin, HW), lambda n: (n, 0, 0)),
                pl.BlockSpec((Cout, 9 * Cin), lambda n: (0, 0)),
                pl.BlockSpec((Cout, 1), lambda n: (0, 0)),
            ],
            out_specs=pl.BlockSpec((1, Cout, HW), lambda n: (n, 0, 0)),
            scratch_shapes=[
                pltpu.VMEM((Cin, (H + 4) * W), x_nchw.dtype),   # padded sample
                pltpu.VMEM((9 * Cin, HW), x_nchw.dtype),        # im2col slab
            ],
        ),
        compiler_params=pltpu.CompilerParams(
            dimension_semantics=("parallel",),
            vmem_limit_bytes=32 * 1024 * 1024,
        ),
    )(x, w, b)
    return out.reshape(N, Cout, H, W)                    # free reshape back to NCHW


def conv_block_reference(x_nchw, weight, bias):
    """Pure-JAX reference matching torch eval semantics."""
    y = jax.lax.conv_general_dilated(
        x_nchw, weight, window_strides=(1, 1), padding=((1, 1), (1, 1)),
        dimension_numbers=("NCHW", "OIHW", "NCHW"))
    y = y + bias[None, :, None, None]
    mean = jnp.mean(y, axis=(2, 3), keepdims=True)
    var = jnp.mean((y - mean) ** 2, axis=(2, 3), keepdims=True)
    y = (y - mean) / jnp.sqrt(var + EPS)
    return jnp.maximum(y, 0.0)


if __name__ == "__main__":
    # Small shapes consistent with ConvBlock(in_chans=4, out_chans=8, drop_prob=0.1)
    N, Cin, Cout, H, W = 2, 4, 8, 16, 16

    key = jax.random.PRNGKey(0)
    kx, kw, kb = jax.random.split(key, 3)
    x = jax.random.normal(kx, (N, Cin, H, W), dtype=jnp.float32)
    fan_in = Cin * 3 * 3
    weight = jax.random.normal(kw, (Cout, Cin, 3, 3), dtype=jnp.float32) / jnp.sqrt(fan_in)
    bias = jax.random.normal(kb, (Cout,), dtype=jnp.float32) * 0.01

    out = conv_block_forward(x, weight, bias)
    out = jax.block_until_ready(out)

    ref = jax.block_until_ready(conv_block_reference(x, weight, bias))
    assert out.shape == (N, Cout, H, W), out.shape
    assert jnp.allclose(out, ref, rtol=2e-3, atol=2e-3), (
        float(jnp.max(jnp.abs(out - ref))))

    print("KERNEL_OK")
</pallas_src>

<mosaic_0001>
module attributes {stable_mosaic.version = 11 : i64} {
  func.func @conv_block_kernel(%arg0: i32, %arg1: memref<1x4x256xf32, #tpu.memory_space<vmem>>, %arg2: memref<8x36xf32, #tpu.memory_space<vmem>>, %arg3: memref<8x1xf32, #tpu.memory_space<vmem>>, %arg4: memref<1x8x256xf32, #tpu.memory_space<vmem>>, %arg5: memref<4x320xf32, #tpu.memory_space<vmem>>, %arg6: memref<36x256xf32, #tpu.memory_space<vmem>>) attributes {dimension_semantics = [#tpu.dimension_semantics<parallel>], iteration_bounds = array<i64: 2>, scalar_prefetch = 0 : i64, scratch_operands = 2 : i64, tpu.core_type = #tpu.core_type<tc>, window_params = [{transform_indices = @transform_0, window_bounds = array<i64: 1, 4, 256>}, {pipeline_mode = #tpu.pipeline_mode<synchronous>, transform_indices = @transform_1, window_bounds = array<i64: 8, 36>}, {pipeline_mode = #tpu.pipeline_mode<synchronous>, transform_indices = @transform_2, window_bounds = array<i64: 8, 1>}, {transform_indices = @transform_3, window_bounds = array<i64: 1, 8, 256>}]} {
    %cst = arith.constant 0.000000e+00 : f32
    %0 = vector.broadcast %cst : f32 to vector<4x32xf32>
    %c0 = arith.constant 0 : index
    %c0_0 = arith.constant 0 : index
    %1 = vector.load %arg5[%c0, %c0_0] : memref<4x320xf32, #tpu.memory_space<vmem>>, vector<4x32xf32>
    tpu.vector_store %arg5[%c0, %c0_0], %0 {strides = array<i32>} : memref<4x320xf32, #tpu.memory_space<vmem>>, vector<4x32xf32>,
    %c0_1 = arith.constant 0 : index
    %c288 = arith.constant 288 : index
    %2 = vector.load %arg5[%c0_1, %c288] : memref<4x320xf32, #tpu.memory_space<vmem>>, vector<4x32xf32>
    tpu.vector_store %arg5[%c0_1, %c288], %0 {strides = array<i32>} : memref<4x320xf32, #tpu.memory_space<vmem>>, vector<4x32xf32>,
    %c0_2 = arith.constant 0 : index
    %c0_3 = arith.constant 0 : index
    %c0_4 = arith.constant 0 : index
    %3 = vector.load %arg1[%c0_2, %c0_3, %c0_4] : memref<1x4x256xf32, #tpu.memory_space<vmem>>, vector<1x4x256xf32>
    %4 = vector.shape_cast %3 : vector<1x4x256xf32> to vector<4x256xf32>
    %c0_5 = arith.constant 0 : index
    %c32 = arith.constant 32 : index
    %5 = vector.load %arg5[%c0_5, %c32] : memref<4x320xf32, #tpu.memory_space<vmem>>, vector<4x256xf32>
    tpu.vector_store %arg5[%c0_5, %c32], %4 {strides = array<i32>} : memref<4x320xf32, #tpu.memory_space<vmem>>, vector<4x256xf32>,
    %6 = tpu.iota {dimensions = array<i32: 1>} : vector<1x256xi32>
    %c16_i32 = arith.constant 16 : i32
    %c0_i32 = arith.constant 0 : i32
    %7 = arith.cmpi eq, %c16_i32, %c0_i32 : i32
    %c1_i32 = arith.constant 1 : i32
    %8 = arith.select %7, %c1_i32, %c16_i32 : i32
    %9 = vector.broadcast %8 : i32 to vector<1x256xi32>
    %10 = arith.remsi %6, %9 : vector<1x256xi32>
    %c0_i32_6 = arith.constant 0 : i32
    %11 = vector.broadcast %c0_i32_6 : i32 to vector<1x256xi32>
    %12 = arith.cmpi ne, %10, %11 : vector<1x256xi32>
    %c0_i32_7 = arith.constant 0 : i32
    %13 = vector.broadcast %c0_i32_7 : i32 to vector<1x256xi32>
    %14 = arith.cmpi slt, %10, %13 : vector<1x256xi32>
    %c0_i32_8 = arith.constant 0 : i32
    %15 = arith.cmpi slt, %8, %c0_i32_8 : i32
    %16 = vector.broadcast %15 : i1 to vector<1x256xi1>
    %17 = vector.broadcast %16 : vector<1x256xi1> to vector<1x256xi1>
    %18 = arith.xori %14, %17 : vector<1x256xi1>
    %19 = arith.andi %18, %12 : vector<1x256xi1>
    %20 = vector.broadcast %8 : i32 to vector<1x256xi32>
    %21 = arith.addi %10, %20 : vector<1x256xi32>
    %22 = arith.select %19, %21, %10 : vector<1x256xi1>, vector<1x256xi32>
    %c1_i32_9 = arith.constant 1 : i32
    %23 = vector.broadcast %c1_i32_9 : i32 to vector<1x256xi32>
    %24 = arith.cmpi sge, %22, %23 : vector<1x256xi32>
    %c14_i32 = arith.constant 14 : i32
    %25 = vector.broadcast %c14_i32 : i32 to vector<1x256xi32>
    %26 = arith.cmpi sle, %22, %25 : vector<1x256xi32>
    %c0_10 = arith.constant 0 : index
    %c15 = arith.constant 15 : index
    %27 = vector.load %arg5[%c0_10, %c15] : memref<4x320xf32, #tpu.memory_space<vmem>>, vector<4x256xf32>
    %cst_11 = arith.constant 0.000000e+00 : f32
    %28 = vector.shape_cast %24 : vector<1x256xi1> to vector<1x256xi1>
    %29 = vector.broadcast %28 : vector<1x256xi1> to vector<4x256xi1>
    %30 = vector.broadcast %cst_11 : f32 to vector<4x256xf32>
    %31 = arith.select %29, %27, %30 : vector<4x256xi1>, vector<4x256xf32>
    %c0_12 = arith.constant 0 : index
    %c0_13 = arith.constant 0 : index
    %32 = vector.load %arg6[%c0_12, %c0_13] : memref<36x256xf32, #tpu.memory_space<vmem>>, vector<4x256xf32>
    tpu.vector_store %arg6[%c0_12, %c0_13], %31 {strides = array<i32>} : memref<36x256xf32, #tpu.memory_space<vmem>>, vector<4x256xf32>,
    %c0_14 = arith.constant 0 : index
    %c16 = arith.constant 16 : index
    %33 = vector.load %arg5[%c0_14, %c16] : memref<4x320xf32, #tpu.memory_space<vmem>>, vector<4x256xf32>
    %c4 = arith.constant 4 : index
    %c0_15 = arith.constant 0 : index
    %34 = vector.load %arg6[%c4, %c0_15] : memref<36x256xf32, #tpu.memory_space<vmem>>, vector<4x256xf32>
    tpu.vector_store %arg6[%c4, %c0_15], %33 {strides = array<i32>} : memref<36x256xf32, #tpu.memory_space<vmem>>, vector<4x256xf32>,
    %c0_16 = arith.constant 0 : index
    %c17 = arith.constant 17 : index
    %35 = vector.load %arg5[%c0_16, %c17] : memref<4x320xf32, #tpu.memory_space<vmem>>, vector<4x256xf32>
    %cst_17 = arith.constant 0.000000e+00 : f32
    %36 = vector.shape_cast %26 : vector<1x256xi1> to vector<1x256xi1>
    %37 = vector.broadcast %36 : vector<1x256xi1> to vector<4x256xi1>
    %38 = vector.broadcast %cst_17 : f32 to vector<4x256xf32>
    %39 = arith.select %37, %35, %38 : vector<4x256xi1>, vector<4x256xf32>
    %c8 = arith.constant 8 : index
    %c0_18 = arith.constant 0 : index
    %40 = vector.load %arg6[%c8, %c0_18] : memref<36x256xf32, #tpu.memory_space<vmem>>, vector<4x256xf32>
    tpu.vector_store %arg6[%c8, %c0_18], %39 {strides = array<i32>} : memref<36x256xf32, #tpu.memory_space<vmem>>, vector<4x256xf32>,
    %c0_19 = arith.constant 0 : index
    %c31 = arith.constant 31 : index
    %41 = vector.load %arg5[%c0_19, %c31] : memref<4x320xf32, #tpu.memory_space<vmem>>, vector<4x256xf32>
    %cst_20 = arith.constant 0.000000e+00 : f32
    %42 = vector.shape_cast %24 : vector<1x256xi1> to vector<1x256xi1>
    %43 = vector.broadcast %42 : vector<1x256xi1> to vector<4x256xi1>
    %44 = vector.broadcast %cst_20 : f32 to vector<4x256xf32>
    %45 = arith.select %43, %41, %44 : vector<4x256xi1>, vector<4x256xf32>
    %c12 = arith.constant 12 : index
    %c0_21 = arith.constant 0 : index
    %46 = vector.load %arg6[%c12, %c0_21] : memref<36x256xf32, #tpu.memory_space<vmem>>, vector<4x256xf32>
    tpu.vector_store %arg6[%c12, %c0_21], %45 {strides = array<i32>} : memref<36x256xf32, #tpu.memory_space<vmem>>, vector<4x256xf32>,
    %c0_22 = arith.constant 0 : index
    %c32_23 = arith.constant 32 : index
    %47 = vector.load %arg5[%c0_22, %c32_23] : memref<4x320xf32, #tpu.memory_space<vmem>>, vector<4x256xf32>
    %c16_24 = arith.constant 16 : index
    %c0_25 = arith.constant 0 : index
    %48 = vector.load %arg6[%c16_24, %c0_25] : memref<36x256xf32, #tpu.memory_space<vmem>>, vector<4x256xf32>
    tpu.vector_store %arg6[%c16_24, %c0_25], %47 {strides = array<i32>} : memref<36x256xf32, #tpu.memory_space<vmem>>, vector<4x256xf32>,
    %c0_26 = arith.constant 0 : index
    %c33 = arith.constant 33 : index
    %49 = vector.load %arg5[%c0_26, %c33] : memref<4x320xf32, #tpu.memory_space<vmem>>, vector<4x256xf32>
    %cst_27 = arith.constant 0.000000e+00 : f32
    %50 = vector.shape_cast %26 : vector<1x256xi1> to vector<1x256xi1>
    %51 = vector.broadcast %50 : vector<1x256xi1> to vector<4x256xi1>
    %52 = vector.broadcast %cst_27 : f32 to vector<4x256xf32>
    %53 = arith.select %51, %49, %52 : vector<4x256xi1>, vector<4x256xf32>
    %c20 = arith.constant 20 : index
    %c0_28 = arith.constant 0 : index
    %54 = vector.load %arg6[%c20, %c0_28] : memref<36x256xf32, #tpu.memory_space<vmem>>, vector<4x256xf32>
    tpu.vector_store %arg6[%c20, %c0_28], %53 {strides = array<i32>} : memref<36x256xf32, #tpu.memory_space<vmem>>, vector<4x256xf32>,
    %c0_29 = arith.constant 0 : index
    %c47 = arith.constant 47 : index
    %55 = vector.load %arg5[%c0_29, %c47] : memref<4x320xf32, #tpu.memory_space<vmem>>, vector<4x256xf32>
    %cst_30 = arith.constant 0.000000e+00 : f32
    %56 = vector.shape_cast %24 : vector<1x256xi1> to vector<1x256xi1>
    %57 = vector.broadcast %56 : vector<1x256xi1> to vector<4x256xi1>
    %58 = vector.broadcast %cst_30 : f32 to vector<4x256xf32>
    %59 = arith.select %57, %55, %58 : vector<4x256xi1>, vector<4x256xf32>
    %c24 = arith.constant 24 : index
    %c0_31 = arith.constant 0 : index
    %60 = vector.load %arg6[%c24, %c0_31] : memref<36x256xf32, #tpu.memory_space<vmem>>, vector<4x256xf32>
    tpu.vector_store %arg6[%c24, %c0_31], %59 {strides = array<i32>} : memref<36x256xf32, #tpu.memory_space<vmem>>, vector<4x256xf32>,
    %c0_32 = arith.constant 0 : index
    %c48 = arith.constant 48 : index
    %61 = vector.load %arg5[%c0_32, %c48] : memref<4x320xf32, #tpu.memory_space<vmem>>, vector<4x256xf32>
    %c28 = arith.constant 28 : index
    %c0_33 = arith.constant 0 : index
    %62 = vector.load %arg6[%c28, %c0_33] : memref<36x256xf32, #tpu.memory_space<vmem>>, vector<4x256xf32>
    tpu.vector_store %arg6[%c28, %c0_33], %61 {strides = array<i32>} : memref<36x256xf32, #tpu.memory_space<vmem>>, vector<4x256xf32>,
    %c0_34 = arith.constant 0 : index
    %c49 = arith.constant 49 : index
    %63 = vector.load %arg5[%c0_34, %c49] : memref<4x320xf32, #tpu.memory_space<vmem>>, vector<4x256xf32>
    %cst_35 = arith.constant 0.000000e+00 : f32
    %64 = vector.shape_cast %26 : vector<1x256xi1> to vector<1x256xi1>
    %65 = vector.broadcast %64 : vector<1x256xi1> to vector<4x256xi1>
    %66 = vector.broadcast %cst_35 : f32 to vector<4x256xf32>
    %67 = arith.select %65, %63, %66 : vector<4x256xi1>, vector<4x256xf32>
    %c32_36 = arith.constant 32 : index
    %c0_37 = arith.constant 0 : index
    %68 = vector.load %arg6[%c32_36, %c0_37] : memref<36x256xf32, #tpu.memory_space<vmem>>, vector<4x256xf32>
    tpu.vector_store %arg6[%c32_36, %c0_37], %67 {strides = array<i32>} : memref<36x256xf32, #tpu.memory_space<vmem>>, vector<4x256xf32>,
    %c0_38 = arith.constant 0 : index
    %c0_39 = arith.constant 0 : index
    %69 = vector.load %arg2[%c0_38, %c0_39] : memref<8x36xf32, #tpu.memory_space<vmem>>, vector<8x36xf32>
    %c0_40 = arith.constant 0 : index
    %c0_41 = arith.constant 0 : index
    %70 = vector.load %arg6[%c0_40, %c0_41] : memref<36x256xf32, #tpu.memory_space<vmem>>, vector<36x256xf32>
    %cst_42 = arith.constant dense<0.000000e+00> : vector<8x256xf32>
    %71 = tpu.matmul %69, %70, %cst_42 {dimension_numbers = #tpu.dot_dimension_numbers<[1], [0], [0], [1], [0, 0, 1, 1], [], []>} : vector<8x36xf32>, vector<36x256xf32>, vector<8x256xf32> -> vector<8x256xf32>
    %c0_43 = arith.constant 0 : index
    %c0_44 = arith.constant 0 : index
    %72 = vector.load %arg3[%c0_43, %c0_44] : memref<8x1xf32, #tpu.memory_space<vmem>>, vector<8x1xf32>
    %73 = vector.broadcast %72 : vector<8x1xf32> to vector<8x256xf32>
    %74 = arith.addf %71, %73 : vector<8x256xf32>
    %cst_45 = arith.constant dense<0.000000e+00> : vector<8xf32>
    %75 = vector.multi_reduction <add>, %74, %cst_45 [1] : vector<8x256xf32> to vector<8xf32>
    %76 = vector.shape_cast %75 : vector<8xf32> to vector<8x1xf32>
    %cst_46 = arith.constant 2.560000e+02 : f32
    %77 = vector.broadcast %cst_46 : f32 to vector<8x1xf32>
    %78 = arith.divf %76, %77 : vector<8x1xf32>
    %79 = vector.broadcast %78 : vector<8x1xf32> to vector<8x256xf32>
    %80 = arith.subf %74, %79 : vector<8x256xf32>
    %81 = arith.mulf %80, %80 : vector<8x256xf32>
    %cst_47 = arith.constant dense<0.000000e+00> : vector<8xf32>
    %82 = vector.multi_reduction <add>, %81, %cst_47 [1] : vector<8x256xf32> to vector<8xf32>
    %83 = vector.shape_cast %82 : vector<8xf32> to vector<8x1xf32>
    %cst_48 = arith.constant 2.560000e+02 : f32
    %84 = vector.broadcast %cst_48 : f32 to vector<8x1xf32>
    %85 = arith.divf %83, %84 : vector<8x1xf32>
    %86 = vector.broadcast %78 : vector<8x1xf32> to vector<8x256xf32>
    %87 = arith.subf %74, %86 : vector<8x256xf32>
    %cst_49 = arith.constant 9.99999974E-6 : f32
    %88 = vector.broadcast %cst_49 : f32 to vector<8x1xf32>
    %89 = arith.addf %85, %88 : vector<8x1xf32>
    %90 = math.rsqrt %89 : vector<8x1xf32>
    %91 = vector.broadcast %90 : vector<8x1xf32> to vector<8x256xf32>
    %92 = arith.mulf %87, %91 : vector<8x256xf32>
    %cst_50 = arith.constant 0.000000e+00 : f32
    %93 = vector.broadcast %cst_50 : f32 to vector<8x256xf32>
    %94 = arith.maximumf %92, %93 : vector<8x256xf32>
    %c0_51 = arith.constant 0 : index
    %c0_52 = arith.constant 0 : index
    %c0_53 = arith.constant 0 : index
    %95 = vector.load %arg4[%c0_51, %c0_52, %c0_53] : memref<1x8x256xf32, #tpu.memory_space<vmem>>, vector<1x8x256xf32>
    %96 = vector.shape_cast %95 : vector<1x8x256xf32> to vector<8x256xf32>
    %97 = vector.shape_cast %94 : vector<8x256xf32> to vector<1x8x256xf32>
    tpu.vector_store %arg4[%c0_51, %c0_52, %c0_53], %97 {strides = array<i32>} : memref<1x8x256xf32, #tpu.memory_space<vmem>>, vector<1x8x256xf32>,
    return
  }
  func.func @transform_0(%arg0: i32) -> (i32, i32, i32) {
    %c0_i32 = arith.constant 0 : i32
    %c0_i32_0 = arith.constant 0 : i32
    %c0_i32_1 = arith.constant 0 : i32
    return %arg0, %c0_i32, %c0_i32_0 : i32, i32, i32
  }
  func.func @transform_1(%arg0: i32) -> (i32, i32) {
    %c0_i32 = arith.constant 0 : i32
    %c0_i32_0 = arith.constant 0 : i32
    %c0_i32_1 = arith.constant 0 : i32
    return %c0_i32, %c0_i32_0 : i32, i32
  }
  func.func @transform_2(%arg0: i32) -> (i32, i32) {
    %c0_i32 = arith.constant 0 : i32
    %c0_i32_0 = arith.constant 0 : i32
    %c0_i32_1 = arith.constant 0 : i32
    return %c0_i32, %c0_i32_0 : i32, i32
  }
  func.func @transform_3(%arg0: i32) -> (i32, i32, i32) {
    %c0_i32 = arith.constant 0 : i32
    %c0_i32_0 = arith.constant 0 : i32
    %c0_i32_1 = arith.constant 0 : i32
    return %arg0, %c0_i32, %c0_i32_0 : i32, i32, i32
  }
}

</mosaic_0001>

<llo_original>
// kernel: tpu_custom_call.1
$region0: #{tpu_custom_call.1}
  #allocation0 [shape = 'u32[]', space=smem, size = 0x4, offset = 0x4, fixed_abs, tag = 'smem constant byte address 0x4 - core index']
  #allocation1 [shape = 'u32[144,128]{1,0:T(1,128)}', space=vmem, size = 0x12000, scoped, tag = 'internal scratch']
  #allocation2 [shape = 'f32[4,320]{1,0:T(4,128)}', space=vmem, size = 0x1800, scoped, tag = 'scratch operand']
  #allocation3 [shape = 'f32[36,256]{1,0:T(8,128)}', space=vmem, size = 0xa000, scoped, tag = 'scratch operand']
  %s0 = inlined_call_operand.hbm [shape: f32[2,4,256], index: 0, kind: input, shape index: {}]
  %s1 = inlined_call_operand.vmem [shape: f32[8,36], index: 1, kind: input, shape index: {}]
  %s2 = inlined_call_operand.vmem [shape: f32[8,1], index: 2, kind: input, shape index: {}]
  %s3 = inlined_call_operand.hbm [shape: f32[2,8,256], index: 3, kind: output, shape index: {}]
  %s4 = sld [smem:[#allocation0]]
  $region49: #{tpu_custom_call.1} parent=0
    _
  %s6 = ssub.s32 1, %s4
  %s7 = scalar_select 0, %s6, %s4
  $region1: #{tpu_custom_call.1} parent=0
    #allocation4 [shape = 'u8[8192]{0}', space=vmem, size = 0x2000, scoped, tag = 'input window, operand 0']
    #allocation5 [shape = 's32[2]{0}', space=sflag, size = 0x8, scoped, tag = 'scoped memory for tpu_custom_call.1']
    #allocation6 [shape = 's32[2]{0}', space=sflag, size = 0x8, scoped, tag = 'scoped memory for tpu_custom_call.1']
    #allocation7 [shape = 'u8[16384]{0}', space=vmem, size = 0x4000, scoped, tag = 'output window, operand 0']
    %8 = vsyncpa [#allocation5], 0
    %s9 = scalar_lea.sflag [#allocation5], 1
    %10 = vsyncpa %s9, 0
    %11 = vsyncpa [#allocation6], 0
    %s12 = scalar_lea.sflag [#allocation6], 1
    %13 = vsyncpa %s12, 0
    loop: start=0, step=1, limit=4
    $region2: #{tpu_custom_call.1} parent=1 // loop_pre_header
      _
    $region3: #{tpu_custom_call.1} parent=1 // loop_header
      %s15 = sphi 0, %s19
      %p16 = scmp.ge.s32.totalorder %s15, 4
      %s25 = sphi 0, %s27
      %s28 = sphi 0, %s25
      %s29 = sphi 0, %s28
      %s45 = sphi 0, %s29
      %s49 = sphi 0, %s49
      %s51 = sphi 0, %s49
      %s52 = sphi 0, %s51
      %s66 = sphi 0, %s52
      %s70 = sphi 0, %s70
      %s72 = sphi 0, %s70
      %s73 = sphi 0, %s72
      %s87 = sphi 0, %s73
      %s93 = sphi 0, %s95
      %s96 = sphi 0, %s93
      %s97 = sphi 0, %s96
      %s113 = sphi 0, %s97
    $region4: #{tpu_custom_call.1} parent=1 // loop_header_branch
      %18 = sbr.rel (%p16) target = $region8
    $region5: #{tpu_custom_call.1} parent=1 // loop_body
      %s20 = ssub.s32 %s15, 1
      %s21 = ssub.s32 %s15, 2
      %s22 = sadd.s32 %s15, 1
      %s23 = ssub.s32 %s15, %s22
      %p24 = scmp.eq.s32.totalorder %s23, 0
      %s26 = sadd.s32 %s25, 1
      %s27 = scalar_select %p24, %s25, %s26
      %p30 = pneg %p24
      %p31 = scmp.eq.s32.totalorder %s15, 1
      %p32 = por %p30, %p31
      %p33 = scmp.ne.s32.totalorder %s25, %s28
      %p34 = scmp.eq.s32.totalorder %s15, 0
      %p35 = por %p33, %p34
      %p36 = scmp.ne.s32.totalorder %s25, %s28
      %p37 = scmp.eq.s32.totalorder %s20, 1
      %p38 = por %p36, %p37
      %p39 = scmp.ne.s32.totalorder %s28, %s29
      %p40 = scmp.eq.s32.totalorder %s20, 0
      %p41 = por %p39, %p40
      %p42 = scmp.ne.s32.totalorder %s28, %s29
      %p43 = scmp.eq.s32.totalorder %s21, 1
      %p44 = por %p42, %p43
      %p46 = scmp.ne.s32.totalorder %s29, %s45
      %p47 = scmp.eq.s32.totalorder %s21, 0
      %p48 = por %p46, %p47
      %s50 = sadd.s32 %s49, 1
      %p53 = scmp.eq.s32.totalorder %s15, 1
      %p54 = scmp.ne.s32.totalorder %s49, %s51
      %p55 = scmp.eq.s32.totalorder %s15, 0
      %p56 = por %p54, %p55
      %p57 = scmp.ne.s32.totalorder %s49, %s51
      %p58 = scmp.eq.s32.totalorder %s20, 1
      %p59 = por %p57, %p58
      %p60 = scmp.ne.s32.totalorder %s51, %s52
      %p61 = scmp.eq.s32.totalorder %s20, 0
      %p62 = por %p60, %p61
      %p63 = scmp.ne.s32.totalorder %s51, %s52
      %p64 = scmp.eq.s32.totalorder %s21, 1
      %p65 = por %p63, %p64
      %p67 = scmp.ne.s32.totalorder %s52, %s66
      %p68 = scmp.eq.s32.totalorder %s21, 0
      %p69 = por %p67, %p68
      %s71 = sadd.s32 %s70, 1
      %p74 = scmp.eq.s32.totalorder %s15, 1
      %p75 = scmp.ne.s32.totalorder %s70, %s72
      %p76 = scmp.eq.s32.totalorder %s15, 0
      %p77 = por %p75, %p76
      %p78 = scmp.ne.s32.totalorder %s70, %s72
      %p79 = scmp.eq.s32.totalorder %s20, 1
      %p80 = por %p78, %p79
      %p81 = scmp.ne.s32.totalorder %s72, %s73
      %p82 = scmp.eq.s32.totalorder %s20, 0
      %p83 = por %p81, %p82
      %p84 = scmp.ne.s32.totalorder %s72, %s73
      %p85 = scmp.eq.s32.totalorder %s21, 1
      %p86 = por %p84, %p85
      %p88 = scmp.ne.s32.totalorder %s73, %s87
      %p89 = scmp.eq.s32.totalorder %s21, 0
      %p90 = por %p88, %p89
      %s91 = ssub.s32 %s15, %s22
      %p92 = scmp.eq.s32.totalorder %s91, 0
      %s94 = sadd.s32 %s93, 1
      %s95 = scalar_select %p92, %s93, %s94
      %p98 = pneg %p92
      %p99 = scmp.eq.s32.totalorder %s15, 1
      %p100 = por %p98, %p99
      %p101 = scmp.ne.s32.totalorder %s93, %s96
      %p102 = scmp.eq.s32.totalorder %s15, 0
      %p103 = por %p101, %p102
      %p104 = scmp.ne.s32.totalorder %s93, %s96
      %p105 = scmp.eq.s32.totalorder %s20, 1
      %p106 = por %p104, %p105
      %p107 = scmp.ne.s32.totalorder %s96, %s97
      %p108 = scmp.eq.s32.totalorder %s20, 0
      %p109 = por %p107, %p108
      %p110 = scmp.ne.s32.totalorder %s96, %s97
      %p111 = scmp.eq.s32.totalorder %s21, 1
      %p112 = por %p110, %p111
      %p114 = scmp.ne.s32.totalorder %s97, %s113
      %p115 = scmp.eq.s32.totalorder %s21, 0
      %p116 = por %p114, %p115
      %p117 = scmp.le.s32.totalorder 1, %s15
      %p118 = scmp.lt.s32.totalorder %s15, 3
      %p119 = pnand %p117, %p118
      %p120 = pneg %p119
      // Predicated region
      $region9: #{tpu_custom_call.1} parent=5 // pred_check
        _
      $region10: #{tpu_custom_call.1} parent=5 // pred_check_branch
        %122 = sbr.rel (%p119) target = $region12
      $region11: #{tpu_custom_call.1} parent=5 // pred_region
        %s123 = ssub.s32 %s15, 1
        // Predicated region
        $region13: #{tpu_custom_call.1} parent=11 // pred_check
          %p124 = pneg %p62
        $region14: #{tpu_custom_call.1} parent=11 // pred_check_branch
          %126 = sbr.rel (%p124) target = $region16
        $region15: #{tpu_custom_call.1} parent=11 // pred_region
          _
        $region16: #{tpu_custom_call.1} parent=11 // pred_fallthru
          _
        // Predicated region
        $region17: #{tpu_custom_call.1} parent=11 // pred_check
          %p127 = pneg %p83
        $region18: #{tpu_custom_call.1} parent=11 // pred_check_branch
          %129 = sbr.rel (%p127) target = $region20
        $region19: #{tpu_custom_call.1} parent=11 // pred_region
          _
        $region20: #{tpu_custom_call.1} parent=11 // pred_fallthru
          _
      $region12: #{tpu_custom_call.1} parent=5 // pred_fallthru
        _
      %p130 = scmp.lt.s32.totalorder %s15, 2
      // Predicated region
      $region21: #{tpu_custom_call.1} parent=5 // pred_check
        %p131 = pneg %p130
      $region22: #{tpu_custom_call.1} parent=5 // pred_check_branch
        %133 = sbr.rel (%p131) target = $region24
      $region23: #{tpu_custom_call.1} parent=5 // pred_region
        // Predicated region
        $region25: #{tpu_custom_call.1} parent=23 // pred_check
          %p134 = pneg %p35
        $region26: #{tpu_custom_call.1} parent=23 // pred_check_branch
          %136 = sbr.rel (%p134) target = $region28
        $region27: #{tpu_custom_call.1} parent=23 // pred_region
          %s137 = sand.u32 %s25, 1
          %s138 = scalar_lea.sflag [#allocation5], %s137
          %s139 = sand.u32 %s25, 1
          %s140 = smul.addr %s139, 8
          %s141 = scalar_lea.vmem [#allocation4], %s140
          %s143 = ssub.s32 128, 128
          %144 = vsyncadd %s138, %s143
          %s145 = smul.addr %s15, 2
          %s146 = smul.addr %s145, 64
          %s147 = scalar_lea.hbm %s0, %s146
          %s149 = sshll.u32 %s141, 4
          %s150 = int_to_ptr.vmem [resolvable:$true] %s149
          %152 = dma.hbm_to_vmem [thread:$0]  %s147, 128, %s150, %s138
        $region28: #{tpu_custom_call.1} parent=23 // pred_fallthru
          _
      $region24: #{tpu_custom_call.1} parent=5 // pred_fallthru
        _
      %p153 = scmp.le.s32.totalorder 1, %s15
      %p154 = scmp.lt.s32.totalorder %s15, 3
      %p155 = pnand %p153, %p154
      %p156 = pneg %p155
      // Predicated region
      $region29: #{tpu_custom_call.1} parent=5 // pred_check
        _
      $region30: #{tpu_custom_call.1} parent=5 // pred_check_branch
        %158 = sbr.rel (%p155) target = $region32
      $region31: #{tpu_custom_call.1} parent=5 // pred_region
        %s159 = ssub.s32 %s15, 1
        %s160 = sand.u32 %s28, 1
        %s161 = scalar_lea.sflag [#allocation5], %s160
        %s162 = sand.u32 %s28, 1
        %s163 = smul.addr %s162, 8
        %s164 = scalar_lea.vmem [#allocation4], %s163
        // Predicated region
        $region33: #{tpu_custom_call.1} parent=31 // pred_check
          %p165 = pneg %p41
        $region34: #{tpu_custom_call.1} parent=31 // pred_check_branch
          %167 = sbr.rel (%p165) target = $region36
        $region35: #{tpu_custom_call.1} parent=31 // pred_region
          %168 = dma.done %s161, 128
        $region36: #{tpu_custom_call.1} parent=31 // pred_fallthru
          _
        %s169 = sand.u32 %s28, 1
        %s170 = scalar_lea.sflag [#allocation5], %s169
        %s171 = sand.u32 %s28, 1
        %s172 = smul.addr %s171, 8
        %s173 = scalar_lea.vmem [#allocation4], %s172
        %p174 = pneg %p41
        %p175 = pneg %p38
        %p176 = pneg %p62
        %p177 = pneg %p59
        %p178 = pneg %p83
        %p179 = pneg %p80
        %p180 = pneg %p109
        %p181 = pneg %p106
        %s182 = sand.u32 %s96, 1
        %s183 = scalar_lea.sflag [#allocation6], %s182
        %s184 = sand.u32 %s96, 1
        %s185 = smul.addr %s184, 16
        %s186 = scalar_lea.vmem [#allocation7], %s185
        %vm187 = vcmask 257024
        %188 = vst.msk [vmem:[#allocation2] sm:$0xf] %vm187, 0.0
        %vm189 = vcmask 519424
        %190 = vst.msk [vmem:[#allocation2 + $0x8] sm:$0xf] %vm189, 0.0
        %v191 = vld [vmem:[%s164] sm:$0xff]
        %193 = vrot.lane.b32.xlu0 %v191, 32
        %v194 = vpop.permute.xlu0 %193
        %v195 = vrot.slane %v194, 4
        %vm196 = vcmask 261120
        %v197 = vsel %vm196, %v195, %v194
        %vm200 = vcmask 1043712
        %vm201 = vcmask 1047556
        %vm202 = vmor %vm201, %vm200
        %203 = vst.msk [vmem:[#allocation2] sm:$0xff] %vm202, %v197
        %204 = vst.msk [vmem:[#allocation2 + $0x8] sm:$0xf] %vm187, %v195
        %v205 = vlaneseq
        %v206 = vand.u32 %v205, 127
        %v207 = vadd.s32 %v206, 128
        %vm208 = vcmp.lt.s32.totalorder %v206, 0
        %v209 = vsub.s32 0, %v206
        %v210 = vsel %vm208, %v209, %v206
        %v211 = vshrl.u32 %v210, 4
        %v212 = vand.u32 %v210, 15
        %v213 = vsub.s32 0, %v212
        %v214 = vsel %vm208, %v213, %v212
        %vm215 = vcmp.lt.s32.totalorder %v207, 0
        %v216 = vsub.s32 0, %v207
        %v217 = vsel %vm215, %v216, %v207
        %v218 = vshrl.u32 %v217, 4
        %v219 = vand.u32 %v217, 15
        %v220 = vsub.s32 0, %v219
        %v221 = vsel %vm215, %v220, %v219
        %vm222 = vcmp.ne.s32.totalorder %v214, 0
        %vm223 = vcmp.ne.s32.totalorder %v221, 0
        %vm224 = vcmp.lt.s32.totalorder %v214, 0
        %vm225 = vcmp.lt.s32.totalorder %v221, 0
        %vm226 = vmand %vm224, %vm222
        %vm227 = vmand %vm225, %vm223
        %v228 = vadd.s32 %v214, 16
        %v229 = vadd.s32 %v221, 16
        %v230 = vsel %vm226, %v228, %v214
        %v231 = vsel %vm227, %v229, %v221
        %vm232 = vcmp.ge.s32.totalorder %v230, 1
        %vm233 = vcmp.ge.s32.totalorder %v231, 1
        %vm234 = vcmp.le.s32.totalorder %v230, 14
        %vm235 = vcmp.le.s32.totalorder %v231, 14
        %v236 = vld [vmem:[#allocation2] sm:$0xff]
        %v237 = vld [vmem:[#allocation2 + $0x8] sm:$0xf]
        %v238 = vsel %vm232, 1, 0
        %v239 = vsel %vm233, 1, 0
        %vm240 = vcmp.eq.s32.totalorder %v238, 1
        %vm241 = vcmp.eq.s32.totalorder %v239, 1
        %v244 = vcombine.high %v236, %v236
        %245 = vrot.lane.b32.xlu0 %v236, 113
        %v246 = vpop.permute.xlu0 %245
        %247 = vrot.lane.b32.xlu0 %v244, 113
        %v248 = vpop.permute.xlu0 %247
        %249 = vrot.lane.b32.xlu0 %v237, 113
        %v250 = vpop.permute.xlu0 %249
        %vm251 = vcmask 924672
        %v252 = vsel %vm251, %v246, %v248
        %v253 = vsel %vm251, %v248, %v250
        %v256 = vsel %vm240, %v252, 0.0
        %v257 = vsel %vm241, %v253, 0.0
        %258 = vst [vmem:[#allocation3] sm:$0xf] %v256
        %259 = vst [vmem:[#allocation3 + $0x8] sm:$0xf] %v257
        %v260 = vld [vmem:[#allocation2] sm:$0xff]
        %v261 = vld [vmem:[#allocation2 + $0x8] sm:$0xf]
        %v264 = vcombine.low %v260, %v260
        %v265 = vcombine.low %v261, %v261
        %266 = vrot.lane.b32.xlu0 %v264, 112
        %v267 = vpop.permute.xlu0 %266
        %268 = vrot.lane.b32.xlu0 %v260, 112
        %v269 = vpop.permute.xlu0 %268
        %270 = vrot.lane.b32.xlu0 %v265, 112
        %v271 = vpop.permute.xlu0 %270
        %vm272 = vcmask 916480
        %v273 = vsel %vm272, %v267, %v269
        %v274 = vsel %vm272, %v269, %v271
        %277 = vst [vmem:[#allocation3] sm:$0xf0] %v273
        %278 = vst [vmem:[#allocation3 + $0x8] sm:$0xf0] %v274
        %v279 = vld [vmem:[#allocation2] sm:$0xff]
        %v280 = vld [vmem:[#allocation2 + $0x8] sm:$0xf]
        %v281 = vsel %vm234, 1, 0
        %v282 = vsel %vm235, 1, 0
        %vm283 = vcmp.eq.s32.totalorder %v281, 1
        %vm284 = vcmp.eq.s32.totalorder %v282, 1
        %v287 = vcombine.high %v279, %v279
        %288 = vrot.lane.b32.xlu0 %v279, 111
        %v289 = vpop.permute.xlu0 %288
        %290 = vrot.lane.b32.xlu0 %v287, 111
        %v291 = vpop.permute.xlu0 %290
        %292 = vrot.lane.b32.xlu0 %v280, 111
        %v293 = vpop.permute.xlu0 %292
        %vm294 = vcmask 908288
        %v295 = vsel %vm294, %v289, %v291
        %v296 = vsel %vm294, %v291, %v293
        %v299 = vsel %vm283, %v295, 0.0
        %v300 = vsel %vm284, %v296, 0.0
        %301 = vst [vmem:[#allocation3 + $0x10] sm:$0xf] %v299
        %302 = vst [vmem:[#allocation3 + $0x18] sm:$0xf] %v300
        %v303 = vld [vmem:[#allocation2] sm:$0xff]
        %v304 = vld [vmem:[#allocation2 + $0x8] sm:$0xf]
        %v307 = vcombine.high %v303, %v303
        %308 = vrot.lane.b32.xlu0 %v303, 97
        %v309 = vpop.permute.xlu0 %308
        %310 = vrot.lane.b32.xlu0 %v307, 97
        %v311 = vpop.permute.xlu0 %310
        %312 = vrot.lane.b32.xlu0 %v304, 97
        %v313 = vpop.permute.xlu0 %312
        %vm314 = vcmask 793600
        %v315 = vsel %vm314, %v309, %v311
        %v316 = vsel %vm314, %v311, %v313
        %v319 = vsel %vm240, %v315, 0.0
        %v320 = vsel %vm241, %v316, 0.0
        %v323 = vrot.slane %v319, 4
        %v324 = vrot.slane %v320, 4
        %327 = vst [vmem:[#allocation3 + $0x10] sm:$0xf0] %v323
        %328 = vst [vmem:[#allocation3 + $0x18] sm:$0xf0] %v324
        %v329 = vld [vmem:[#allocation2] sm:$0xff]
        %v330 = vld [vmem:[#allocation2 + $0x8] sm:$0xf]
        %v333 = vcombine.high %v329, %v329
        %334 = vrot.lane.b32.xlu0 %v329, 96
        %v335 = vpop.permute.xlu0 %334
        %336 = vrot.lane.b32.xlu0 %v333, 96
        %v337 = vpop.permute.xlu0 %336
        %338 = vrot.lane.b32.xlu0 %v330, 96
        %v339 = vpop.permute.xlu0 %338
        %vm340 = vcmask 785408
        %v341 = vsel %vm340, %v335, %v337
        %v342 = vsel %vm340, %v337, %v339
        %345 = vst [vmem:[#allocation3 + $0x20] sm:$0xf] %v341
        %346 = vst [vmem:[#allocation3 + $0x28] sm:$0xf] %v342
        %v347 = vld [vmem:[#allocation2] sm:$0xff]
        %v348 = vld [vmem:[#allocation2 + $0x8] sm:$0xf]
        %v351 = vcombine.high %v347, %v347
        %352 = vrot.lane.b32.xlu0 %v347, 95
        %v353 = vpop.permute.xlu0 %352
        %354 = vrot.lane.b32.xlu0 %v351, 95
        %v355 = vpop.permute.xlu0 %354
        %356 = vrot.lane.b32.xlu0 %v348, 95
        %v357 = vpop.permute.xlu0 %356
        %vm358 = vcmask 777216
        %v359 = vsel %vm358, %v353, %v355
        %v360 = vsel %vm358, %v355, %v357
        %v363 = vsel %vm283, %v359, 0.0
        %v364 = vsel %vm284, %v360, 0.0
        %v367 = vrot.slane %v363, 4
        %v368 = vrot.slane %v364, 4
        %371 = vst [vmem:[#allocation3 + $0x20] sm:$0xf0] %v367
        %372 = vst [vmem:[#allocation3 + $0x28] sm:$0xf0] %v368
        %v373 = vld [vmem:[#allocation2] sm:$0xff]
        %v374 = vld [vmem:[#allocation2 + $0x8] sm:$0xf]
        %v377 = vcombine.high %v373, %v373
        %378 = vrot.lane.b32.xlu0 %v373, 81
        %v379 = vpop.permute.xlu0 %378
        %380 = vrot.lane.b32.xlu0 %v377, 81
        %v381 = vpop.permute.xlu0 %380
        %382 = vrot.lane.b32.xlu0 %v374, 81
        %v383 = vpop.permute.xlu0 %382
        %vm384 = vcmask 662528
        %v385 = vsel %vm384, %v379, %v381
        %v386 = vsel %vm384, %v381, %v383
        %v389 = vsel %vm240, %v385, 0.0
        %v390 = vsel %vm241, %v386, 0.0
        %391 = vst [vmem:[#allocation3 + $0x30] sm:$0xf] %v389
        %392 = vst [vmem:[#allocation3 + $0x38] sm:$0xf] %v390
        %v393 = vld [vmem:[#allocation2] sm:$0xff]
        %v394 = vld [vmem:[#allocation2 + $0x8] sm:$0xf]
        %v397 = vcombine.low %v393, %v393
        %v398 = vcombine.low %v394, %v394
        %399 = vrot.lane.b32.xlu0 %v397, 80
        %v400 = vpop.permute.xlu0 %399
        %401 = vrot.lane.b32.xlu0 %v393, 80
        %v402 = vpop.permute.xlu0 %401
        %403 = vrot.lane.b32.xlu0 %v398, 80
        %v404 = vpop.permute.xlu0 %403
        %vm405 = vcmask 654336
        %v406 = vsel %vm405, %v400, %v402
        %v407 = vsel %vm405, %v402, %v404
        %410 = vst [vmem:[#allocation3 + $0x30] sm:$0xf0] %v406
        %411 = vst [vmem:[#allocation3 + $0x38] sm:$0xf0] %v407
        %v412 = vld [vmem:[#allocation2] sm:$0xff]
        %v413 = vld [vmem:[#allocation2 + $0x8] sm:$0xf]
        %v416 = vcombine.high %v412, %v412
        %417 = vrot.lane.b32.xlu0 %v412, 79
        %v418 = vpop.permute.xlu0 %417
        %419 = vrot.lane.b32.xlu0 %v416, 79
        %v420 = vpop.permute.xlu0 %419
        %421 = vrot.lane.b32.xlu0 %v413, 79
        %v422 = vpop.permute.xlu0 %421
        %vm423 = vcmask 646144
        %v424 = vsel %vm423, %v418, %v420
        %v425 = vsel %vm423, %v420, %v422
        %v428 = vsel %vm283, %v424, 0.0
        %v429 = vsel %vm284, %v425, 0.0
        %430 = vst [vmem:[#allocation3 + $0x40] sm:$0xf] %v428
        %431 = vst [vmem:[#allocation3 + $0x48] sm:$0xf] %v429
        %v432 = vld [vmem:[%s1] sm:$0xff]
        %v433 = vld [vmem:[#allocation3] sm:$0xff]
        %v434 = vld [vmem:[#allocation3 + $0x8] sm:$0xff]
        %v435 = vld [vmem:[#allocation3 + $0x10] sm:$0xff]
        %v436 = vld [vmem:[#allocation3 + $0x18] sm:$0xff]
        %v437 = vld [vmem:[#allocation3 + $0x20] sm:$0xff]
        %v438 = vld [vmem:[#allocation3 + $0x28] sm:$0xff]
        %v439 = vld [vmem:[#allocation3 + $0x30] sm:$0xff]
        %v440 = vld [vmem:[#allocation3 + $0x38] sm:$0xff]
        %v441 = vld [vmem:[#allocation3 + $0x40] sm:$0xf]
        %v442 = vld [vmem:[#allocation3 + $0x48] sm:$0xf]
        %v443 = vld [vmem:[%s2] sm:$0xff]
        %445 = vset.pattern.permute.xlu0 0
        %446 = vperm.xlu0 %445, %v443
        %v447 = vpop.permute.xlu0 %446
        %vm449 = vcmask 293888
        %v451 = vsel %vm449, %v432, 0
        %vm453 = vcmask 1043456
        %v455 = vsel %vm453, %v441, 0
        %v458 = vsel %vm453, %v442, 0
        %460 = vmatprep.subr.mxu0 %v434
        %461 = vmatpush1.msra.mxu0 %v433
        %462 = vmatprep.subr.mxu0 %v436
        %463 = vmatpush1.msra.mxu0 %v435
        %464 = vmatprep.subr.mxu0 %v438
        %465 = vmatpush1.msra.mxu0 %v437
        %466 = vmatprep.subr.mxu0 %v440
        %467 = vmatpush1.msra.mxu0 %v439
        %468 = vmatprep.subr.mxu0 %v458
        %469 = vmatpush1.msra.mxu0 %v455
        %470 = vmatprep.subr.mxu0 0.0
        %471 = vmatpush1.msra.mxu0 0.0
        %472 = vmatprep.subr.mxu0 0.0
        %473 = vmatpush1.msra.mxu0 0.0
        %474 = vmatprep.subr.mxu0 0.0
        %475 = vmatpush1.msra.mxu0 0.0
        %476 = vmatprep.subr.mxu0 0.0
        %477 = vmatpush1.msra.mxu0 0.0
        %478 = vmatprep.subr.mxu0 0.0
        %479 = vmatpush1.msra.mxu0 0.0
        %480 = vmatprep.subr.mxu0 0.0
        %481 = vmatpush1.msra.mxu0 0.0
        %482 = vmatprep.subr.mxu0 0.0
        %483 = vmatpush1.msra.mxu0 0.0
        %484 = vmatprep.subr.mxu0 0.0
        %485 = vmatpush1.msra.mxu0 0.0
        %486 = vmatprep.subr.mxu0 0.0
        %487 = vmatpush1.msra.mxu0 0.0
        %488 = vmatprep.subr.mxu0 0.0
        %489 = vmatpush1.msra.mxu0 0.0
        %490 = vmatprep.subr.mxu0 0.0
        %491 = vmatpush1.msra.mxu0 0.0
        %492 = vmatprep.subr.mxu0 0.0
        %493 = vmatpush1.msra.mxu0 0.0
        %494 = vmatprep.subr.mxu0 0.0
        %495 = vmatpush1.msra.mxu0 0.0
        %496 = vmatprep.subr.mxu0 0.0
        %497 = vmatpush1.msra.mxu0 0.0
        %498 = vmatprep.subr.mxu0 0.0
        %499 = vmatpush1.msra.mxu0 0.0
        %500 = vmatprep.subr.mxu0 0.0
        %501 = vmatpush1.msra.mxu0 0.0
        %502 = vmatprep.subr.mxu0 0.0
        %503 = vmatpush1.msra.mxu0 0.0
        %504 = vmatprep.subr.mxu0 0.0
        %505 = vmatpush1.msra.mxu0 0.0
        %506 = vmatprep.subr.mxu0 0.0
        %507 = vmatpush1.msra.mxu0 0.0
        %508 = vmatprep.subr.mxu0 0.0
        %509 = vmatpush1.msra.mxu0 0.0
        %510 = vmatprep.subr.mxu0 0.0
        %511 = vmatpush1.msra.mxu0 0.0
        %512 = vmatprep.subr.mxu0 0.0
        %513 = vmatpush1.msra.mxu0 0.0
        %514 = vmatprep.subr.mxu0 0.0
        %515 = vmatpush1.msra.mxu0 0.0
        %516 = vmatprep.subr.mxu0 0.0
        %517 = vmatpush1.msra.mxu0 0.0
        %518 = vmatprep.subr.mxu0 0.0
        %519 = vmatpush1.msra.mxu0 0.0
        %520 = vmatprep.subr.mxu0 0.0
        %521 = vmatpush1.msra.mxu0 0.0
        %522 = vmatprep.subr.mxu0 0.0
        %523 = vmatpush1.msra.mxu0 0.0
        %524 = vmatprep.mubr.f32.mxu0 0.0
        %525 = vmatmul.mubr.f32.gmra.mrb[0].mxu0 %v451
        %v526 = vpop.f32.mrb[0].mxu0
        %v527 = vadd.f32 %v447, %v526
        %v528 = vpop.f32.mrb[0].mxu0
        %v529 = vadd.f32 %v447, %v528
        %530 = vdwg.mxu0
        %v531 = vadd.f32 %v527, %v529
        %532 = vadd.xlane.f32.xlu0 %v531
        %v533 = vpop.xlane.xlu0 %532
        %v534 = vrcp.pop 256.0
        %v535 = vmul.f32 %v533, %v534
        %v536 = vsub.f32 %v527, %v535
        %v537 = vsub.f32 %v529, %v535
        %v538 = vmul.f32 %v536, %v536
        %v539 = vmul.f32 %v537, %v537
        %v540 = vadd.f32 %v538, %v539
        %541 = vadd.xlane.f32.xlu0 %v540
        %v542 = vpop.xlane.xlu0 %541
        %v543 = vmul.f32 %v542, %v534
        %v544 = vadd.f32 %v543, 1e-05
        %v545 = vrsqrt.pop %v544
        %v546 = vmul.f32 %v536, %v545
        %v547 = vmul.f32 %v537, %v545
        %v548 = vmax.f32 %v546, 0.0
        %v549 = vmax.f32 %v547, 0.0
        %550 = vst [vmem:[%s186] sm:$0xff] %v548
        %551 = vst [vmem:[%s186 + $0x8] sm:$0xff] %v549
        %s552 = sand.u32 %s96, 1
        %s553 = scalar_lea.sflag [#allocation6], %s552
        %s554 = sand.u32 %s96, 1
        %s555 = smul.addr %s554, 16
        %s556 = scalar_lea.vmem [#allocation7], %s555
        // Predicated region
        $region37: #{tpu_custom_call.1} parent=31 // pred_check
          %p557 = pneg %p106
        $region38: #{tpu_custom_call.1} parent=31 // pred_check_branch
          %559 = sbr.rel (%p557) target = $region40
        $region39: #{tpu_custom_call.1} parent=31 // pred_region
          %s561 = ssub.s32 256, 256
          %562 = vsyncadd %s553, %s561
          %s563 = smul.addr %s20, 2
          %s564 = smul.addr %s563, 128
          %s565 = scalar_lea.hbm %s3, %s564
          %s567 = sshll.u32 %s556, 4
          %s568 = int_to_ptr.vmem [resolvable:$true] %s567
          %570 = dma.vmem_to_hbm [thread:$0]  %s568, 256, %s565, %s553
        $region40: #{tpu_custom_call.1} parent=31 // pred_fallthru
          _
      $region32: #{tpu_custom_call.1} parent=5 // pred_fallthru
        _
      %p571 = scmp.le.s32.totalorder 2, %s15
      // Predicated region
      $region41: #{tpu_custom_call.1} parent=5 // pred_check
        %p572 = pneg %p571
      $region42: #{tpu_custom_call.1} parent=5 // pred_check_branch
        %574 = sbr.rel (%p572) target = $region44
      $region43: #{tpu_custom_call.1} parent=5 // pred_region
        %s575 = ssub.s32 %s15, 2
        // Predicated region
        $region45: #{tpu_custom_call.1} parent=43 // pred_check
          %p576 = pneg %p112
        $region46: #{tpu_custom_call.1} parent=43 // pred_check_branch
          %578 = sbr.rel (%p576) target = $region48
        $region47: #{tpu_custom_call.1} parent=43 // pred_region
          %s579 = sand.u32 %s97, 1
          %s580 = scalar_lea.sflag [#allocation6], %s579
          %s581 = sand.u32 %s97, 1
          %s582 = smul.addr %s581, 16
          %s583 = scalar_lea.vmem [#allocation7], %s582
          %584 = dma.done %s580, 256
        $region48: #{tpu_custom_call.1} parent=43 // pred_fallthru
          _
      $region44: #{tpu_custom_call.1} parent=5 // pred_fallthru
        _
    $region6: #{tpu_custom_call.1} parent=1 // loop_footer
      %s19 = sadd.s32 1, %s15
    $region7: #{tpu_custom_call.1} parent=1 // loop_footer_branch
      %14 = sbr.rel target = $region3
    $region8: #{tpu_custom_call.1} parent=1 // loop_exit
      _
    %585 = vsyncpa [#allocation5], 1
    %s586 = scalar_lea.sflag [#allocation5], 1
    %587 = vsyncpa %s586, 1
    %588 = vsyncpa [#allocation6], 1
    %s589 = scalar_lea.sflag [#allocation6], 1
    %590 = vsyncpa %s589, 1

</llo_original>
